<compile_context>
chip_gen: v7x
topology: tpu7x:2x2x1
jax: 0.10.0
libtpu: 0.0.40
codegen_flags: <defaults>
</compile_context>

<pallas_src>
import numpy as np
import jax
import jax.numpy as jnp
from jax.experimental import pallas as pl
from jax.experimental.pallas import tpu as pltpu

# ---- synthetic LoRA serving config (deterministic, in-script) -----------------
NUM_ADAPTERS = 3
LORA_R = 4
LORA_ALPHA = 8
LORA_SCALE = float(LORA_ALPHA) / float(LORA_R)


def _round_up(x, m):
    return (x + m - 1) // m * m


# ------------------------------ kernel ----------------------------------------
def lora_linear_kernel(tile_aid_ref,                          # scalar prefetch (SMEM)
                       x_ref, w_ref, bias_ref, a_ref, b_ref,  # VMEM input tiles
                       o_ref,                                 # VMEM output tile
                       acc_ref, ax_ref):                      # f32 VMEM scratch
    # x_ref:    (tm, tk)     bf16   grouped token tile
    # w_ref:    (tk, tn)     bf16   base W^T tile
    # bias_ref: (1, tn)      f32
    # a_ref:    (1, tk, r_p) bf16   LoRA A for this tile's adapter
    # b_ref:    (1, r_p, tn) bf16   LoRA B for this tile's adapter
    # acc_ref:  (tm, tn)     f32    base accumulator over K     (reset per (m,n))
    # ax_ref:   (tm, r_p)    f32    x @ A accumulator over K    (reset per m, carried over n)
    del tile_aid_ref
    n = pl.program_id(1)
    k = pl.program_id(2)
    nk = pl.num_programs(2)

    @pl.when(k == 0)
    def _init_acc():
        acc_ref[...] = jnp.zeros_like(acc_ref)

    @pl.when(jnp.logical_and(n == 0, k == 0))
    def _init_ax():
        ax_ref[...] = jnp.zeros_like(ax_ref)

    x = x_ref[...]                                                        # (tm, tk)
    acc_ref[...] += jnp.dot(x, w_ref[...], preferred_element_type=jnp.float32)

    # Low-rank x@A is independent of the output-column tile: compute it only on
    # the n==0 sweep; the scratch result is reused for every n>0 at finalize.
    @pl.when(n == 0)
    def _lora_a():
        ax_ref[...] += jnp.dot(x, a_ref[0], preferred_element_type=jnp.float32)

    @pl.when(k == nk - 1)
    def _finalize():
        b_blk = b_ref[0]                                                  # (r_p, tn)
        lora = jnp.dot(ax_ref[...].astype(b_blk.dtype), b_blk,
                       preferred_element_type=jnp.float32)                # (tm, tn)
        out = acc_ref[...] + bias_ref[...] + LORA_SCALE * lora            # f32 epilogue
        o_ref[...] = out.astype(o_ref.dtype)


# --------------------------- weight preparation --------------------------------
def prepare_lora_weights(w_t, bias, lora_a, lora_b, *, tn=1024, tk=1024):
    """Pad + cast static weights ONCE (hoist out of the serving hot path).

    w_t: [H,O] (already transposed), bias: [1,O], lora_a: [NA,H,r], lora_b: [NA,r,O].
    """
    H, O = w_t.shape
    NA, _, r = lora_a.shape
    r_pad = _round_up(r, 128)                         # lane-dense rank padding
    tk = min(tk, _round_up(H, 128))
    tn = min(tn, _round_up(O, 128))
    H_pad = _round_up(H, tk)
    O_pad = _round_up(O, tn)

    # bf16 MXU inputs; bias stays f32 for the epilogue.
    # TODO(synk): on v7x, W could be stored fp8 to halve its HBM stream.
    w_p = jnp.pad(w_t, ((0, H_pad - H), (0, O_pad - O))).astype(jnp.bfloat16)
    bias_p = jnp.pad(bias, ((0, 0), (0, O_pad - O))).astype(jnp.float32)
    a_p = jnp.pad(lora_a, ((0, 0), (0, H_pad - H), (0, r_pad - r))).astype(jnp.bfloat16)
    b_p = jnp.pad(lora_b, ((0, 0), (0, r_pad - r), (0, O_pad - O))).astype(jnp.bfloat16)
    return dict(w=w_p, bias=bias_p, a=a_p, b=b_p,
                H=H, O=O, r=r, r_pad=r_pad, H_pad=H_pad, O_pad=O_pad, tn=tn, tk=tk)


# ------------------------------ serving call ------------------------------------
def multi_lora_linear(x, adapter_ids, prep, *, tm=256, out_dtype=jnp.bfloat16,
                      vmem_limit_bytes=48 * 1024 * 1024):
    """x: [B,S,H] f32/bf16, adapter_ids: [B] i32, prep: prepare_lora_weights() output.
       Returns [B,S,O] in out_dtype (default bf16)."""
    B, S, H = x.shape
    assert H == prep["H"]
    O, r_pad = prep["O"], prep["r_pad"]
    H_pad, O_pad, tn, tk = prep["H_pad"], prep["O_pad"], prep["tn"], prep["tk"]
    NA = prep["a"].shape[0]

    T = B * S
    # tm: multiple of 16 (bf16 sublane packing), clamped to the token count.
    tm = min(tm, max(16, _round_up(T, 16)))

    # ---- MoE-style permute: group tokens by adapter, pad each group to tm ----
    flat_adapter = jnp.repeat(adapter_ids.astype(jnp.int32), S)            # [T]
    order = jnp.argsort(flat_adapter, stable=True)                         # [T]
    sorted_adapter = flat_adapter[order]
    counts = jnp.zeros((NA,), jnp.int32).at[flat_adapter].add(1)           # [NA]
    padded_counts = ((counts + tm - 1) // tm) * tm                         # [NA]
    group_starts = jnp.concatenate(
        [jnp.zeros((1,), jnp.int32), jnp.cumsum(padded_counts)[:-1]])      # [NA]
    unpadded_starts = jnp.concatenate(
        [jnp.zeros((1,), jnp.int32), jnp.cumsum(counts)[:-1]])             # [NA]
    rank = jnp.arange(T, dtype=jnp.int32) - unpadded_starts[sorted_adapter]
    dest = group_starts[sorted_adapter] + rank                             # [T]

    # Static upper bound on the padded token count (multiple of tm).
    T_pad = _round_up(T, tm) + NA * tm
    num_m_tiles = T_pad // tm

    x_sorted = x.reshape(T, H)[order].astype(jnp.bfloat16)
    x_sorted = jnp.pad(x_sorted, ((0, 0), (0, H_pad - H)))
    xg = jnp.zeros((T_pad, H_pad), jnp.bfloat16).at[dest].set(x_sorted)

    # Per-m-tile adapter id (scalar prefetch).  Unused padding tiles get a
    # clamped id: they compute on zero rows and are never gathered back.
    ends = jnp.cumsum(padded_counts)                                       # [NA]
    tile_start = jnp.arange(num_m_tiles, dtype=jnp.int32) * tm
    tile_aid = jnp.minimum(
        jnp.searchsorted(ends, tile_start, side="right"), NA - 1).astype(jnp.int32)

    grid = (num_m_tiles, O_pad // tn, H_pad // tk)
    m_tiles, n_tiles, k_tiles = grid

    grid_spec = pltpu.PrefetchScalarGridSpec(
        num_scalar_prefetch=1,
        grid=grid,
        in_specs=[
            pl.BlockSpec((tm, tk), lambda m, n, k, aid: (m, k)),                 # x (grouped)
            pl.BlockSpec((tk, tn), lambda m, n, k, aid: (k, n)),                 # W^T
            pl.BlockSpec((1, tn), lambda m, n, k, aid: (0, n)),                  # bias
            # A: streamed over k only on the n==0 sweep; frozen block index for n>0
            # so it is not re-DMA'd per (n,k).
            pl.BlockSpec((1, tk, r_pad),
                         lambda m, n, k, aid: (aid[m], jnp.where(n == 0, k, 0), 0)),
            pl.BlockSpec((1, r_pad, tn), lambda m, n, k, aid: (aid[m], 0, n)),   # B
        ],
        out_specs=pl.BlockSpec((tm, tn), lambda m, n, k, aid: (m, n)),
        scratch_shapes=[
            pltpu.VMEM((tm, tn), jnp.float32),       # base accumulator
            pltpu.VMEM((tm, r_pad), jnp.float32),    # x @ A accumulator (carried over n)
        ],
    )

    # Realistic streaming estimate: W re-read per m tile, x re-read per n tile,
    # A/B read ~once per m tile, bf16 output writeback.
    flops = (2 * T_pad * H_pad * O_pad            # base matmul
             + 2 * T_pad * H_pad * r_pad          # x @ A (n==0 sweep only)
             + 2 * T_pad * r_pad * O_pad)         # (x@A) @ B
    bytes_accessed = (T_pad * H_pad * 2 * n_tiles       # x
                      + H_pad * O_pad * 2 * m_tiles     # W^T
                      + H_pad * r_pad * 2 * m_tiles     # A
                      + r_pad * O_pad * 2 * m_tiles     # B
                      + O_pad * 4                        # bias
                      + T_pad * O_pad * 2)               # output (bf16)
    cost = pl.CostEstimate(flops=int(flops), transcendentals=0,
                           bytes_accessed=int(bytes_accessed))

    # m is "parallel" (2-TC sharding on v7x); n must be "arbitrary" because the
    # x@A scratch computed on the n==0 sweep is reused across n; k is the reduction.
    yg = pl.pallas_call(
        lora_linear_kernel,
        out_shape=jax.ShapeDtypeStruct((T_pad, O_pad), out_dtype),
        grid_spec=grid_spec,
        compiler_params=pltpu.CompilerParams(
            dimension_semantics=("parallel", "arbitrary", "arbitrary"),
            vmem_limit_bytes=vmem_limit_bytes),
        cost_estimate=cost,
    )(tile_aid, xg, prep["w"], prep["bias"], prep["a"], prep["b"])

    # ---- un-permute back to (B, S, O) ----
    y_sorted = yg[dest][:, :O]                                            # [T, O]
    y_flat = jnp.zeros((T, O), yg.dtype).at[order].set(y_sorted)
    return y_flat.reshape(B, S, O)


# ------------------------------ reference --------------------------------------
def reference(x, adapter_ids, w_t, bias, lora_a, lora_b):
    # Mirror the kernel's numerics: bf16 MXU inputs, f32 accumulation.
    xb = x.astype(jnp.bfloat16)
    wb = w_t.astype(jnp.bfloat16)
    ab = lora_a.astype(jnp.bfloat16)[adapter_ids]    # [B,H,r]
    bb = lora_b.astype(jnp.bfloat16)[adapter_ids]    # [B,r,O]
    base = jnp.einsum("bsh,ho->bso", xb, wb,
                      preferred_element_type=jnp.float32) + bias[None, :, :]
    ax = jnp.einsum("bsh,bhr->bsr", xb, ab, preferred_element_type=jnp.float32)
    lora = jnp.einsum("bsr,bro->bso", ax.astype(jnp.bfloat16), bb,
                      preferred_element_type=jnp.float32)
    return base + LORA_SCALE * lora


if __name__ == "__main__":
    B, S, H, O = 2, 8, 32, 32

    key = jax.random.PRNGKey(0)
    k_x, k_w, k_bias, k_a, k_b = jax.random.split(key, 5)

    x = jax.random.normal(k_x, (B, S, H), dtype=jnp.float32)
    # base Linear params (stands in for the wrapped module's weights), pre-transposed
    w_t = jax.random.normal(k_w, (H, O), dtype=jnp.float32) * 0.1
    bias = jax.random.normal(k_bias, (1, O), dtype=jnp.float32) * 0.1
    # stacked LoRA adapters injected by inject_adapter()
    lora_a = jax.random.normal(k_a, (NUM_ADAPTERS, H, LORA_R), dtype=jnp.float32) * 0.1
    lora_b = jax.random.normal(k_b, (NUM_ADAPTERS, LORA_R, O), dtype=jnp.float32) * 0.1

    adapter_ids = jnp.array([0, 2], dtype=jnp.int32)   # per-sequence adapter selection

    # Static weight padding/cast is hoisted out of the serving hot path.
    prep = prepare_lora_weights(w_t, bias, lora_a, lora_b)

    out = multi_lora_linear(x, adapter_ids, prep)
    out = jax.block_until_ready(out)

    ref = reference(x, adapter_ids, w_t, bias, lora_a, lora_b)
    np.testing.assert_allclose(np.asarray(out, dtype=np.float32), np.asarray(ref),
                               rtol=2e-2, atol=2e-2)

    # TODO(synk): Embedding / Conv2d LoRA targets (MultiLoraModuleEmbedding/Conv2d) and
    # the host-side module-walk/regex injection machinery are not kernel work and are
    # not exercised here; this kernel covers the Linear target path.
    print("KERNEL_OK")
</pallas_src>

<mosaic_0001>
module attributes {stable_mosaic.version = 11 : i64} {
  func.func @lora_linear_kernel(%arg0: i32, %arg1: i32, %arg2: i32, %arg3: memref<4xi32, #tpu.memory_space<smem>>, %arg4: memref<16x128xbf16, #tpu.memory_space<vmem>>, %arg5: memref<128x128xbf16, #tpu.memory_space<vmem>>, %arg6: memref<1x128xf32, #tpu.memory_space<vmem>>, %arg7: memref<1x128x128xbf16, #tpu.memory_space<vmem>>, %arg8: memref<1x128x128xbf16, #tpu.memory_space<vmem>>, %arg9: memref<16x128xbf16, #tpu.memory_space<vmem>>, %arg10: memref<16x128xf32, #tpu.memory_space<vmem>>, %arg11: memref<16x128xf32, #tpu.memory_space<vmem>>) attributes {dimension_semantics = [#tpu.dimension_semantics<parallel>, #tpu.dimension_semantics<arbitrary>, #tpu.dimension_semantics<arbitrary>], iteration_bounds = array<i64: 4, 1, 1>, scalar_prefetch = 1 : i64, scratch_operands = 2 : i64, tpu.core_type = #tpu.core_type<tc>, window_params = [{transform_indices = @transform_0, window_bounds = array<i64: 16, 128>}, {transform_indices = @transform_1, window_bounds = array<i64: 128, 128>}, {transform_indices = @transform_2, window_bounds = array<i64: 1, 128>}, {transform_indices = @transform_3, window_bounds = array<i64: 1, 128, 128>}, {transform_indices = @transform_4, window_bounds = array<i64: 1, 128, 128>}, {transform_indices = @transform_5, window_bounds = array<i64: 16, 128>}]} {
    %c0_i32 = arith.constant 0 : i32
    %0 = arith.cmpi eq, %arg2, %c0_i32 : i32
    %1 = arith.extui %0 : i1 to i32
    %c0_i32_0 = arith.constant 0 : i32
    %2 = arith.cmpi ne, %1, %c0_i32_0 : i32
    scf.if %2 {
      %cst_15 = arith.constant 0.000000e+00 : f32
      %20 = vector.broadcast %cst_15 : f32 to vector<16x128xf32>
      %c0_16 = arith.constant 0 : index
      %c0_17 = arith.constant 0 : index
      %21 = vector.load %arg10[%c0_16, %c0_17] : memref<16x128xf32, #tpu.memory_space<vmem>>, vector<16x128xf32>
      tpu.vector_store %arg10[%c0_16, %c0_17], %20 {strides = array<i32>} : memref<16x128xf32, #tpu.memory_space<vmem>>, vector<16x128xf32>,
    } else {
    }
    %c0_i32_1 = arith.constant 0 : i32
    %3 = arith.cmpi eq, %arg1, %c0_i32_1 : i32
    %c0_i32_2 = arith.constant 0 : i32
    %4 = arith.cmpi eq, %arg2, %c0_i32_2 : i32
    %5 = arith.andi %3, %4 : i1
    %6 = arith.extui %5 : i1 to i32
    %c0_i32_3 = arith.constant 0 : i32
    %7 = arith.cmpi ne, %6, %c0_i32_3 : i32
    scf.if %7 {
      %cst_15 = arith.constant 0.000000e+00 : f32
      %20 = vector.broadcast %cst_15 : f32 to vector<16x128xf32>
      %c0_16 = arith.constant 0 : index
      %c0_17 = arith.constant 0 : index
      %21 = vector.load %arg11[%c0_16, %c0_17] : memref<16x128xf32, #tpu.memory_space<vmem>>, vector<16x128xf32>
      tpu.vector_store %arg11[%c0_16, %c0_17], %20 {strides = array<i32>} : memref<16x128xf32, #tpu.memory_space<vmem>>, vector<16x128xf32>,
    } else {
    }
    %c0 = arith.constant 0 : index
    %c0_4 = arith.constant 0 : index
    %8 = vector.load %arg4[%c0, %c0_4] : memref<16x128xbf16, #tpu.memory_space<vmem>>, vector<16x128xbf16>
    %c0_5 = arith.constant 0 : index
    %c0_6 = arith.constant 0 : index
    %9 = vector.load %arg10[%c0_5, %c0_6] : memref<16x128xf32, #tpu.memory_space<vmem>>, vector<16x128xf32>
    %c0_7 = arith.constant 0 : index
    %c0_8 = arith.constant 0 : index
    %10 = vector.load %arg5[%c0_7, %c0_8] : memref<128x128xbf16, #tpu.memory_space<vmem>>, vector<128x128xbf16>
    %cst = arith.constant dense<0.000000e+00> : vector<16x128xf32>
    %11 = tpu.matmul %8, %10, %cst {dimension_numbers = #tpu.dot_dimension_numbers<[1], [0], [0], [1], [0, 0, 1, 1], [], []>} : vector<16x128xbf16>, vector<128x128xbf16>, vector<16x128xf32> -> vector<16x128xf32>
    %12 = arith.addf %9, %11 : vector<16x128xf32>
    %c0_9 = arith.constant 0 : index
    %c0_10 = arith.constant 0 : index
    %13 = vector.load %arg10[%c0_9, %c0_10] : memref<16x128xf32, #tpu.memory_space<vmem>>, vector<16x128xf32>
    tpu.vector_store %arg10[%c0_9, %c0_10], %12 {strides = array<i32>} : memref<16x128xf32, #tpu.memory_space<vmem>>, vector<16x128xf32>,
    %c0_i32_11 = arith.constant 0 : i32
    %14 = arith.cmpi eq, %arg1, %c0_i32_11 : i32
    %15 = arith.extui %14 : i1 to i32
    %c0_i32_12 = arith.constant 0 : i32
    %16 = arith.cmpi ne, %15, %c0_i32_12 : i32
    scf.if %16 {
      %c0_15 = arith.constant 0 : index
      %c0_16 = arith.constant 0 : index
      %20 = vector.load %arg11[%c0_15, %c0_16] : memref<16x128xf32, #tpu.memory_space<vmem>>, vector<16x128xf32>
      %c0_17 = arith.constant 0 : index
      %c0_18 = arith.constant 0 : index
      %c0_19 = arith.constant 0 : index
      %21 = vector.load %arg7[%c0_17, %c0_18, %c0_19] : memref<1x128x128xbf16, #tpu.memory_space<vmem>>, vector<1x128x128xbf16>
      %22 = vector.shape_cast %21 : vector<1x128x128xbf16> to vector<128x128xbf16>
      %cst_20 = arith.constant dense<0.000000e+00> : vector<16x128xf32>
      %23 = tpu.matmul %8, %22, %cst_20 {dimension_numbers = #tpu.dot_dimension_numbers<[1], [0], [0], [1], [0, 0, 1, 1], [], []>} : vector<16x128xbf16>, vector<128x128xbf16>, vector<16x128xf32> -> vector<16x128xf32>
      %24 = arith.addf %20, %23 : vector<16x128xf32>
      %c0_21 = arith.constant 0 : index
      %c0_22 = arith.constant 0 : index
      %25 = vector.load %arg11[%c0_21, %c0_22] : memref<16x128xf32, #tpu.memory_space<vmem>>, vector<16x128xf32>
      tpu.vector_store %arg11[%c0_21, %c0_22], %24 {strides = array<i32>} : memref<16x128xf32, #tpu.memory_space<vmem>>, vector<16x128xf32>,
    } else {
    }
    %c0_i32_13 = arith.constant 0 : i32
    %17 = arith.cmpi eq, %arg2, %c0_i32_13 : i32
    %18 = arith.extui %17 : i1 to i32
    %c0_i32_14 = arith.constant 0 : i32
    %19 = arith.cmpi ne, %18, %c0_i32_14 : i32
    scf.if %19 {
      %c0_15 = arith.constant 0 : index
      %c0_16 = arith.constant 0 : index
      %c0_17 = arith.constant 0 : index
      %20 = vector.load %arg8[%c0_15, %c0_16, %c0_17] : memref<1x128x128xbf16, #tpu.memory_space<vmem>>, vector<1x128x128xbf16>
      %21 = vector.shape_cast %20 : vector<1x128x128xbf16> to vector<128x128xbf16>
      %c0_18 = arith.constant 0 : index
      %c0_19 = arith.constant 0 : index
      %22 = vector.load %arg11[%c0_18, %c0_19] : memref<16x128xf32, #tpu.memory_space<vmem>>, vector<16x128xf32>
      %23 = arith.truncf %22 : vector<16x128xf32> to vector<16x128xbf16>
      %cst_20 = arith.constant dense<0.000000e+00> : vector<16x128xf32>
      %24 = tpu.matmul %23, %21, %cst_20 {dimension_numbers = #tpu.dot_dimension_numbers<[1], [0], [0], [1], [0, 0, 1, 1], [], []>} : vector<16x128xbf16>, vector<128x128xbf16>, vector<16x128xf32> -> vector<16x128xf32>
      %c0_21 = arith.constant 0 : index
      %c0_22 = arith.constant 0 : index
      %25 = vector.load %arg10[%c0_21, %c0_22] : memref<16x128xf32, #tpu.memory_space<vmem>>, vector<16x128xf32>
      %c0_23 = arith.constant 0 : index
      %c0_24 = arith.constant 0 : index
      %26 = vector.load %arg6[%c0_23, %c0_24] : memref<1x128xf32, #tpu.memory_space<vmem>>, vector<1x128xf32>
      %27 = vector.broadcast %26 : vector<1x128xf32> to vector<16x128xf32>
      %28 = arith.addf %25, %27 : vector<16x128xf32>
      %cst_25 = arith.constant 2.000000e+00 : f32
      %29 = vector.broadcast %cst_25 : f32 to vector<16x128xf32>
      %30 = arith.mulf %29, %24 : vector<16x128xf32>
      %31 = arith.addf %28, %30 : vector<16x128xf32>
      %32 = arith.truncf %31 : vector<16x128xf32> to vector<16x128xbf16>
      %c0_26 = arith.constant 0 : index
      %c0_27 = arith.constant 0 : index
      %33 = vector.load %arg9[%c0_26, %c0_27] : memref<16x128xbf16, #tpu.memory_space<vmem>>, vector<16x128xbf16>
      tpu.vector_store %arg9[%c0_26, %c0_27], %32 {strides = array<i32>} : memref<16x128xbf16, #tpu.memory_space<vmem>>, vector<16x128xbf16>,
    } else {
    }
    return
  }
  func.func @transform_0(%arg0: i32, %arg1: i32, %arg2: i32, %arg3: memref<4xi32, #tpu.memory_space<smem>>) -> (i32, i32) {
    %c0_i32 = arith.constant 0 : i32
    return %arg0, %arg2 : i32, i32
  }
  func.func @transform_1(%arg0: i32, %arg1: i32, %arg2: i32, %arg3: memref<4xi32, #tpu.memory_space<smem>>) -> (i32, i32) {
    %c0_i32 = arith.constant 0 : i32
    return %arg2, %arg1 : i32, i32
  }
  func.func @transform_2(%arg0: i32, %arg1: i32, %arg2: i32, %arg3: memref<4xi32, #tpu.memory_space<smem>>) -> (i32, i32) {
    %c0_i32 = arith.constant 0 : i32
    %c0_i32_0 = arith.constant 0 : i32
    return %c0_i32, %arg1 : i32, i32
  }
  func.func @transform_3(%arg0: i32, %arg1: i32, %arg2: i32, %arg3: memref<4xi32, #tpu.memory_space<smem>>) -> (i32, i32, i32) {
    %0 = arith.index_cast %arg0 : i32 to index
    %1 = memref.load %arg3[%0] : memref<4xi32, #tpu.memory_space<smem>>
    %c0_i32 = arith.constant 0 : i32
    %2 = arith.cmpi eq, %arg1, %c0_i32 : i32
    %c0_i32_0 = arith.constant 0 : i32
    %3 = arith.select %2, %arg2, %c0_i32_0 : i32
    %c0_i32_1 = arith.constant 0 : i32
    %c0_i32_2 = arith.constant 0 : i32
    return %1, %3, %c0_i32_1 : i32, i32, i32
  }
  func.func @transform_4(%arg0: i32, %arg1: i32, %arg2: i32, %arg3: memref<4xi32, #tpu.memory_space<smem>>) -> (i32, i32, i32) {
    %0 = arith.index_cast %arg0 : i32 to index
    %1 = memref.load %arg3[%0] : memref<4xi32, #tpu.memory_space<smem>>
    %c0_i32 = arith.constant 0 : i32
    %c0_i32_0 = arith.constant 0 : i32
    return %1, %c0_i32, %arg1 : i32, i32, i32
  }
  func.func @transform_5(%arg0: i32, %arg1: i32, %arg2: i32, %arg3: memref<4xi32, #tpu.memory_space<smem>>) -> (i32, i32) {
    %c0_i32 = arith.constant 0 : i32
    return %arg0, %arg1 : i32, i32
  }
}

</mosaic_0001>

<llo_original>
// kernel: tpu_custom_call.1
$region0: #{tpu_custom_call.1}
  #allocation0 [shape = 'u32[]', space=smem, size = 0x4, offset = 0x4, fixed_abs, tag = 'smem constant byte address 0x4 - core index']
  #allocation1 [shape = 'u32[144,128]{1,0:T(1,128)}', space=vmem, size = 0x12000, scoped, tag = 'internal scratch']
  #allocation2 [shape = 'f32[16,128]{1,0:T(8,128)}', space=vmem, size = 0x2000, scoped, tag = 'scratch operand']
  #allocation3 [shape = 'f32[16,128]{1,0:T(8,128)}', space=vmem, size = 0x2000, scoped, tag = 'scratch operand']
  #allocation4 [shape = 's32[1]{0}', space=sflag, size = 0x4, scoped, tag = 'scoped memory for tpu_custom_call.1']
  #allocation5 [shape = 'u8[512]{0}', space=smem, size = 0x200, scoped, tag = 'prefetched SMEM operand 0']
  %s0 = inlined_call_operand.hbm [shape: s32[4], index: 0, kind: input, shape index: {}]
  %s1 = inlined_call_operand.hbm [shape: bf16[64,128], index: 1, kind: input, shape index: {}]
  %s2 = inlined_call_operand.hbm [shape: bf16[128,128], index: 2, kind: input, shape index: {}]
  %s3 = inlined_call_operand.vmem [shape: f32[1,128], index: 3, kind: input, shape index: {}]
  %s4 = inlined_call_operand.hbm [shape: bf16[3,128,128], index: 4, kind: input, shape index: {}]
  %s5 = inlined_call_operand.hbm [shape: bf16[3,128,128], index: 5, kind: input, shape index: {}]
  %s6 = inlined_call_operand.hbm [shape: bf16[64,128], index: 6, kind: output, shape index: {}]
  %s7 = sld [smem:[#allocation0]]
  $region85: #{tpu_custom_call.1} parent=0
    _
  %s9 = ssub.s32 1, %s7
  %s10 = scalar_select 0, %s9, %s7
  %12 = dma.hbm_to_smem %s0, 16, [#allocation5], [#allocation4]
  %13 = dma.done [#allocation4], 16
  %14 = sfence
  $region1: #{tpu_custom_call.1} parent=0
    #allocation6 [shape = 'u8[8192]{0}', space=vmem, size = 0x2000, scoped, tag = 'input window, operand 1']
    #allocation7 [shape = 's32[2]{0}', space=sflag, size = 0x8, scoped, tag = 'scoped memory for tpu_custom_call.1']
    #allocation8 [shape = 's32[2]{0}', space=sflag, size = 0x8, scoped, tag = 'scoped memory for tpu_custom_call.1']
    #allocation9 [shape = 'u8[32768]{0}', space=vmem, size = 0x8000, scoped, tag = 'input window, operand 2, single buffered']
    #allocation10 [shape = 's32[1]{0}', space=sflag, size = 0x4, scoped, tag = 'scoped memory for tpu_custom_call.1']
    #allocation11 [shape = 'u8[65536]{0}', space=vmem, size = 0x10000, scoped, tag = 'input window, operand 4']
    #allocation12 [shape = 'u8[65536]{0}', space=vmem, size = 0x10000, scoped, tag = 'input window, operand 5']
    #allocation13 [shape = 'u8[8192]{0}', space=vmem, size = 0x2000, scoped, tag = 'output window, operand 0']
    %15 = vsyncpa [#allocation7], 0
    %s16 = scalar_lea.sflag [#allocation7], 1
    %17 = vsyncpa %s16, 0
    %18 = vsyncpa [#allocation10], 0
    %19 = vsyncpa [#allocation8], 0
    %s20 = scalar_lea.sflag [#allocation8], 1
    %21 = vsyncpa %s20, 0
    loop: start=0, step=1, limit=6
    $region2: #{tpu_custom_call.1} parent=1 // loop_pre_header
      _
    $region3: #{tpu_custom_call.1} parent=1 // loop_header
      %s23 = sphi 0, %s27
      %p24 = scmp.ge.s32.totalorder %s23, 6
      %s30 = sphi 0, %s49
      %s31 = sphi 0, %s45
      %s32 = sphi 0, %s41
      %s33 = sphi 0, %s30
      %s34 = sphi 0, %s31
      %s35 = sphi 0, %s32
      %s36 = sphi 0, %s33
      %s37 = sphi 0, %s34
      %s38 = sphi 0, %s35
      %s54 = sphi 0, %s56
      %s57 = sphi 0, %s54
      %s58 = sphi 0, %s57
      %s74 = sphi 0, %s58
      %s82 = sphi 0, %s84
      %s85 = sphi 0, %s82
      %s86 = sphi 0, %s85
      %s102 = sphi 0, %s86
      %s108 = sphi 0, %s110
      %s111 = sphi 0, %s108
      %s112 = sphi 0, %s111
      %s128 = sphi 0, %s112
      %s142 = sphi 0, %s144
      %s145 = sphi 0, %s142
      %s146 = sphi 0, %s145
      %s162 = sphi 0, %s146
      %s172 = sphi 0, %s174
      %s175 = sphi 0, %s172
      %s176 = sphi 0, %s175
      %s192 = sphi 0, %s176
      %s200 = sphi 0, %s202
      %s203 = sphi 0, %s200
      %s204 = sphi 0, %s203
      %s220 = sphi 0, %s204
    $region4: #{tpu_custom_call.1} parent=1 // loop_header_branch
      %26 = sbr.rel (%p24) target = $region8
    $region5: #{tpu_custom_call.1} parent=1 // loop_body
      %s28 = ssub.s32 %s23, 1
      %s29 = ssub.s32 %s23, 2
      %s39 = sadd.s32 1, %s32
      %p40 = scmp.ge.s32.totalorder %s39, 1
      %s41 = scalar_select %p40, 0, %s39
      %s42 = sadd.s32 1, %s31
      %s43 = scalar_select %p40, %s42, %s31
      %p44 = scmp.ge.s32.totalorder %s43, 1
      %s45 = scalar_select %p44, 0, %s43
      %s46 = sadd.s32 1, %s30
      %s47 = scalar_select %p44, %s46, %s30
      %p48 = scmp.ge.s32.totalorder %s47, 4
      %s49 = scalar_select %p48, 0, %s47
      %s50 = ssub.s32 %s30, %s49
      %s51 = ssub.s32 %s32, %s41
      %s52 = sor.u32 %s50, %s51
      %p53 = scmp.eq.s32.totalorder %s52, 0
      %s55 = sadd.s32 %s54, 1
      %s56 = scalar_select %p53, %s54, %s55
      %p59 = pneg %p53
      %p60 = scmp.eq.s32.totalorder %s23, 3
      %p61 = por %p59, %p60
      %p62 = scmp.ne.s32.totalorder %s54, %s57
      %p63 = scmp.eq.s32.totalorder %s23, 0
      %p64 = por %p62, %p63
      %p65 = scmp.ne.s32.totalorder %s54, %s57
      %p66 = scmp.eq.s32.totalorder %s28, 3
      %p67 = por %p65, %p66
      %p68 = scmp.ne.s32.totalorder %s57, %s58
      %p69 = scmp.eq.s32.totalorder %s28, 0
      %p70 = por %p68, %p69
      %p71 = scmp.ne.s32.totalorder %s57, %s58
      %p72 = scmp.eq.s32.totalorder %s29, 3
      %p73 = por %p71, %p72
      %p75 = scmp.ne.s32.totalorder %s58, %s74
      %p76 = scmp.eq.s32.totalorder %s29, 0
      %p77 = por %p75, %p76
      %s78 = ssub.s32 %s32, %s41
      %s79 = ssub.s32 %s31, %s45
      %s80 = sor.u32 %s78, %s79
      %p81 = scmp.eq.s32.totalorder %s80, 0
      %s83 = sadd.s32 %s82, 1
      %s84 = scalar_select %p81, %s82, %s83
      %p87 = pneg %p81
      %p88 = scmp.eq.s32.totalorder %s23, 3
      %p89 = por %p87, %p88
      %p90 = scmp.ne.s32.totalorder %s82, %s85
      %p91 = scmp.eq.s32.totalorder %s23, 0
      %p92 = por %p90, %p91
      %p93 = scmp.ne.s32.totalorder %s82, %s85
      %p94 = scmp.eq.s32.totalorder %s28, 3
      %p95 = por %p93, %p94
      %p96 = scmp.ne.s32.totalorder %s85, %s86
      %p97 = scmp.eq.s32.totalorder %s28, 0
      %p98 = por %p96, %p97
      %p99 = scmp.ne.s32.totalorder %s85, %s86
      %p100 = scmp.eq.s32.totalorder %s29, 3
      %p101 = por %p99, %p100
      %p103 = scmp.ne.s32.totalorder %s86, %s102
      %p104 = scmp.eq.s32.totalorder %s29, 0
      %p105 = por %p103, %p104
      %s106 = ssub.s32 %s31, %s45
      %p107 = scmp.eq.s32.totalorder %s106, 0
      %s109 = sadd.s32 %s108, 1
      %s110 = scalar_select %p107, %s108, %s109
      %p113 = pneg %p107
      %p114 = scmp.eq.s32.totalorder %s23, 3
      %p115 = por %p113, %p114
      %p116 = scmp.ne.s32.totalorder %s108, %s111
      %p117 = scmp.eq.s32.totalorder %s23, 0
      %p118 = por %p116, %p117
      %p119 = scmp.ne.s32.totalorder %s108, %s111
      %p120 = scmp.eq.s32.totalorder %s28, 3
      %p121 = por %p119, %p120
      %p122 = scmp.ne.s32.totalorder %s111, %s112
      %p123 = scmp.eq.s32.totalorder %s28, 0
      %p124 = por %p122, %p123
      %p125 = scmp.ne.s32.totalorder %s111, %s112
      %p126 = scmp.eq.s32.totalorder %s29, 3
      %p127 = por %p125, %p126
      %p129 = scmp.ne.s32.totalorder %s112, %s128
      %p130 = scmp.eq.s32.totalorder %s29, 0
      %p131 = por %p129, %p130
      %s132 = sld [smem:[#allocation5 + %s30]]
      %p133 = scmp.eq.s32.totalorder %s31, 0
      %s134 = scalar_select %p133, %s32, 0
      %s135 = sld [smem:[#allocation5 + %s49]]
      %p136 = scmp.eq.s32.totalorder %s45, 0
      %s137 = scalar_select %p136, %s41, 0
      %s138 = ssub.s32 %s132, %s135
      %s139 = ssub.s32 %s134, %s137
      %s140 = sor.u32 %s138, %s139
      %p141 = scmp.eq.s32.totalorder %s140, 0
      %s143 = sadd.s32 %s142, 1
      %s144 = scalar_select %p141, %s142, %s143
      %p147 = pneg %p141
      %p148 = scmp.eq.s32.totalorder %s23, 3
      %p149 = por %p147, %p148
      %p150 = scmp.ne.s32.totalorder %s142, %s145
      %p151 = scmp.eq.s32.totalorder %s23, 0
      %p152 = por %p150, %p151
      %p153 = scmp.ne.s32.totalorder %s142, %s145
      %p154 = scmp.eq.s32.totalorder %s28, 3
      %p155 = por %p153, %p154
      %p156 = scmp.ne.s32.totalorder %s145, %s146
      %p157 = scmp.eq.s32.totalorder %s28, 0
      %p158 = por %p156, %p157
      %p159 = scmp.ne.s32.totalorder %s145, %s146
      %p160 = scmp.eq.s32.totalorder %s29, 3
      %p161 = por %p159, %p160
      %p163 = scmp.ne.s32.totalorder %s146, %s162
      %p164 = scmp.eq.s32.totalorder %s29, 0
      %p165 = por %p163, %p164
      %s166 = sld [smem:[#allocation5 + %s30]]
      %s167 = sld [smem:[#allocation5 + %s49]]
      %s168 = ssub.s32 %s166, %s167
      %s169 = ssub.s32 %s31, %s45
      %s170 = sor.u32 %s168, %s169
      %p171 = scmp.eq.s32.totalorder %s170, 0
      %s173 = sadd.s32 %s172, 1
      %s174 = scalar_select %p171, %s172, %s173
      %p177 = pneg %p171
      %p178 = scmp.eq.s32.totalorder %s23, 3
      %p179 = por %p177, %p178
      %p180 = scmp.ne.s32.totalorder %s172, %s175
      %p181 = scmp.eq.s32.totalorder %s23, 0
      %p182 = por %p180, %p181
      %p183 = scmp.ne.s32.totalorder %s172, %s175
      %p184 = scmp.eq.s32.totalorder %s28, 3
      %p185 = por %p183, %p184
      %p186 = scmp.ne.s32.totalorder %s175, %s176
      %p187 = scmp.eq.s32.totalorder %s28, 0
      %p188 = por %p186, %p187
      %p189 = scmp.ne.s32.totalorder %s175, %s176
      %p190 = scmp.eq.s32.totalorder %s29, 3
      %p191 = por %p189, %p190
      %p193 = scmp.ne.s32.totalorder %s176, %s192
      %p194 = scmp.eq.s32.totalorder %s29, 0
      %p195 = por %p193, %p194
      %s196 = ssub.s32 %s30, %s49
      %s197 = ssub.s32 %s31, %s45
      %s198 = sor.u32 %s196, %s197
      %p199 = scmp.eq.s32.totalorder %s198, 0
      %s201 = sadd.s32 %s200, 1
      %s202 = scalar_select %p199, %s200, %s201
      %p205 = pneg %p199
      %p206 = scmp.eq.s32.totalorder %s23, 3
      %p207 = por %p205, %p206
      %p208 = scmp.ne.s32.totalorder %s200, %s203
      %p209 = scmp.eq.s32.totalorder %s23, 0
      %p210 = por %p208, %p209
      %p211 = scmp.ne.s32.totalorder %s200, %s203
      %p212 = scmp.eq.s32.totalorder %s28, 3
      %p213 = por %p211, %p212
      %p214 = scmp.ne.s32.totalorder %s203, %s204
      %p215 = scmp.eq.s32.totalorder %s28, 0
      %p216 = por %p214, %p215
      %p217 = scmp.ne.s32.totalorder %s203, %s204
      %p218 = scmp.eq.s32.totalorder %s29, 3
      %p219 = por %p217, %p218
      %p221 = scmp.ne.s32.totalorder %s204, %s220
      %p222 = scmp.eq.s32.totalorder %s29, 0
      %p223 = por %p221, %p222
      %p224 = scmp.le.s32.totalorder 1, %s23
      %p225 = scmp.lt.s32.totalorder %s23, 5
      %p226 = pnand %p224, %p225
      %p227 = pneg %p226
      // Predicated region
      $region9: #{tpu_custom_call.1} parent=5 // pred_check
        _
      $region10: #{tpu_custom_call.1} parent=5 // pred_check_branch
        %229 = sbr.rel (%p226) target = $region12
      $region11: #{tpu_custom_call.1} parent=5 // pred_region
        %s230 = ssub.s32 %s23, 1
        // Predicated region
        $region13: #{tpu_custom_call.1} parent=11 // pred_check
          %p231 = pneg %p98
        $region14: #{tpu_custom_call.1} parent=11 // pred_check_branch
          %233 = sbr.rel (%p231) target = $region16
        $region15: #{tpu_custom_call.1} parent=11 // pred_region
          %s234 = smul.u32 16, %s35
          %s236 = ssub.s32 1024, 1024
          %237 = vsyncadd [#allocation10], %s236
          %s238 = sadd.s32 %s34, %s234
          %s239 = smul.addr %s238, 64
          %s240 = scalar_lea.hbm %s2, %s239
          %s241 = sshll.u32 [#allocation9], 4
          %s242 = int_to_ptr.vmem [resolvable:$true] %s241
          %247 = dma.hbm_to_vmem [thread:$0]  %s240, 1024, %s242, [#allocation10], 64, 64, 4
        $region16: #{tpu_custom_call.1} parent=11 // pred_fallthru
          _
        // Predicated region
        $region17: #{tpu_custom_call.1} parent=11 // pred_check
          %p248 = pneg %p124
        $region18: #{tpu_custom_call.1} parent=11 // pred_check_branch
          %250 = sbr.rel (%p248) target = $region20
        $region19: #{tpu_custom_call.1} parent=11 // pred_region
          %p251 = scmp.lt.s32.totalorder %s34, 0
          %s252 = scalar_select %p251, %s34, 0
          %s253 = scalar_lea.vmem %s3, %s252
        $region20: #{tpu_custom_call.1} parent=11 // pred_fallthru
          _
      $region12: #{tpu_custom_call.1} parent=5 // pred_fallthru
        _
      %p254 = scmp.lt.s32.totalorder %s23, 4
      // Predicated region
      $region21: #{tpu_custom_call.1} parent=5 // pred_check
        %p255 = pneg %p254
      $region22: #{tpu_custom_call.1} parent=5 // pred_check_branch
        %257 = sbr.rel (%p255) target = $region24
      $region23: #{tpu_custom_call.1} parent=5 // pred_region
        // Predicated region
        $region25: #{tpu_custom_call.1} parent=23 // pred_check
          %p258 = pneg %p64
        $region26: #{tpu_custom_call.1} parent=23 // pred_check_branch
          %260 = sbr.rel (%p258) target = $region28
        $region27: #{tpu_custom_call.1} parent=23 // pred_region
          %s261 = sand.u32 %s23, 1
          %s262 = scalar_lea.sflag [#allocation7], %s261
          %s263 = sand.u32 %s54, 1
          %s264 = smul.addr %s263, 8
          %s265 = scalar_lea.vmem [#allocation6], %s264
          %s266 = smul.u32 2, %s30
          %s268 = ssub.s32 128, 128
          %269 = vsyncadd %s262, %s268
          %s270 = sadd.s32 %s32, %s266
          %s271 = smul.addr %s270, 64
          %s272 = scalar_lea.hbm %s1, %s271
          %s273 = sshll.u32 %s265, 4
          %s274 = int_to_ptr.vmem [resolvable:$true] %s273
          %279 = dma.hbm_to_vmem [thread:$0]  %s272, 128, %s274, %s262, 64, 64, 4
        $region28: #{tpu_custom_call.1} parent=23 // pred_fallthru
          _
        // Predicated region
        $region29: #{tpu_custom_call.1} parent=23 // pred_check
          %p280 = pneg %p152
        $region30: #{tpu_custom_call.1} parent=23 // pred_check_branch
          %282 = sbr.rel (%p280) target = $region32
        $region31: #{tpu_custom_call.1} parent=23 // pred_region
          %s283 = sand.u32 %s23, 1
          %s284 = scalar_lea.sflag [#allocation7], %s283
          %s285 = sand.u32 %s142, 1
          %s286 = smul.addr %s285, 64
          %s287 = scalar_lea.vmem [#allocation11], %s286
          %s288 = sld [smem:[#allocation5 + %s30]]
          %p289 = scmp.eq.s32.totalorder %s31, 0
          %s290 = scalar_select %p289, %s32, 0
          %s291 = smul.u32 16, %s290
          %s293 = ssub.s32 1024, 1024
          %294 = vsyncadd %s284, %s293
          %s295 = smul.addr %s288, 16
          %s296 = sadd.s32 %s291, %s295
          %s297 = smul.addr %s296, 64
          %s298 = scalar_lea.hbm %s4, %s297
          %s299 = sshll.u32 %s287, 4
          %s300 = int_to_ptr.vmem [resolvable:$true] %s299
          %305 = dma.hbm_to_vmem [thread:$0]  %s298, 1024, %s300, %s284, 64, 64, 4
        $region32: #{tpu_custom_call.1} parent=23 // pred_fallthru
          _
        // Predicated region
        $region33: #{tpu_custom_call.1} parent=23 // pred_check
          %p306 = pneg %p182
        $region34: #{tpu_custom_call.1} parent=23 // pred_check_branch
          %308 = sbr.rel (%p306) target = $region36
        $region35: #{tpu_custom_call.1} parent=23 // pred_region
          %s309 = sand.u32 %s23, 1
          %s310 = scalar_lea.sflag [#allocation7], %s309
          %s311 = sand.u32 %s172, 1
          %s312 = smul.addr %s311, 64
          %s313 = scalar_lea.vmem [#allocation12], %s312
          %s314 = sld [smem:[#allocation5 + %s30]]
          %s316 = ssub.s32 1024, 1024
          %317 = vsyncadd %s310, %s316
          %s318 = smul.addr %s314, 16
          %s319 = sadd.s32 %s31, %s318
          %s320 = smul.addr %s319, 64
          %s321 = scalar_lea.hbm %s5, %s320
          %s322 = sshll.u32 %s313, 4
          %s323 = int_to_ptr.vmem [resolvable:$true] %s322
          %328 = dma.hbm_to_vmem [thread:$0]  %s321, 1024, %s323, %s310, 64, 64, 4
        $region36: #{tpu_custom_call.1} parent=23 // pred_fallthru
          _
      $region24: #{tpu_custom_call.1} parent=5 // pred_fallthru
        _
      %p329 = scmp.le.s32.totalorder 1, %s23
      %p330 = scmp.lt.s32.totalorder %s23, 5
      %p331 = pnand %p329, %p330
      %p332 = pneg %p331
      // Predicated region
      $region37: #{tpu_custom_call.1} parent=5 // pred_check
        _
      $region38: #{tpu_custom_call.1} parent=5 // pred_check_branch
        %334 = sbr.rel (%p331) target = $region40
      $region39: #{tpu_custom_call.1} parent=5 // pred_region
        %s335 = ssub.s32 %s23, 1
        %s336 = sand.u32 %s28, 1
        %s337 = scalar_lea.sflag [#allocation7], %s336
        %s338 = sand.u32 %s57, 1
        %s339 = smul.addr %s338, 8
        %s340 = scalar_lea.vmem [#allocation6], %s339
        // Predicated region
        $region41: #{tpu_custom_call.1} parent=39 // pred_check
          %p341 = pneg %p70
        $region42: #{tpu_custom_call.1} parent=39 // pred_check_branch
          %343 = sbr.rel (%p341) target = $region44
        $region43: #{tpu_custom_call.1} parent=39 // pred_region
          %344 = dma.done %s337, 128
        $region44: #{tpu_custom_call.1} parent=39 // pred_fallthru
          _
        // Predicated region
        $region45: #{tpu_custom_call.1} parent=39 // pred_check
          %p345 = pneg %p98
        $region46: #{tpu_custom_call.1} parent=39 // pred_check_branch
          %347 = sbr.rel (%p345) target = $region48
        $region47: #{tpu_custom_call.1} parent=39 // pred_region
          %348 = dma.done [#allocation10], 1024
        $region48: #{tpu_custom_call.1} parent=39 // pred_fallthru
          _
        %s349 = sand.u32 %s28, 1
        %s350 = scalar_lea.sflag [#allocation7], %s349
        %s351 = sand.u32 %s145, 1
        %s352 = smul.addr %s351, 64
        %s353 = scalar_lea.vmem [#allocation11], %s352
        // Predicated region
        $region49: #{tpu_custom_call.1} parent=39 // pred_check
          %p354 = pneg %p158
        $region50: #{tpu_custom_call.1} parent=39 // pred_check_branch
          %356 = sbr.rel (%p354) target = $region52
        $region51: #{tpu_custom_call.1} parent=39 // pred_region
          %357 = dma.done %s350, 1024
        $region52: #{tpu_custom_call.1} parent=39 // pred_fallthru
          _
        %s358 = sand.u32 %s28, 1
        %s359 = scalar_lea.sflag [#allocation7], %s358
        %s360 = sand.u32 %s175, 1
        %s361 = smul.addr %s360, 64
        %s362 = scalar_lea.vmem [#allocation12], %s361
        // Predicated region
        $region53: #{tpu_custom_call.1} parent=39 // pred_check
          %p363 = pneg %p188
        $region54: #{tpu_custom_call.1} parent=39 // pred_check_branch
          %365 = sbr.rel (%p363) target = $region56
        $region55: #{tpu_custom_call.1} parent=39 // pred_region
          %366 = dma.done %s359, 1024
        $region56: #{tpu_custom_call.1} parent=39 // pred_fallthru
          _
        %s367 = sand.u32 %s28, 1
        %s368 = scalar_lea.sflag [#allocation7], %s367
        %s369 = sand.u32 %s57, 1
        %s370 = smul.addr %s369, 8
        %s371 = scalar_lea.vmem [#allocation6], %s370
        %p372 = pneg %p70
        %p373 = pneg %p67
        %p374 = pneg %p98
        %p375 = pneg %p95
        %p376 = scmp.lt.s32.totalorder %s34, 0
        %s377 = scalar_select %p376, %s34, 0
        %s378 = scalar_lea.vmem %s3, %s377
        %p379 = pneg %p124
        %p380 = pneg %p121
        %s381 = sand.u32 %s28, 1
        %s382 = scalar_lea.sflag [#allocation7], %s381
        %s383 = sand.u32 %s145, 1
        %s384 = smul.addr %s383, 64
        %s385 = scalar_lea.vmem [#allocation11], %s384
        %p386 = pneg %p158
        %p387 = pneg %p155
        %s388 = sand.u32 %s28, 1
        %s389 = scalar_lea.sflag [#allocation7], %s388
        %s390 = sand.u32 %s175, 1
        %s391 = smul.addr %s390, 64
        %s392 = scalar_lea.vmem [#allocation12], %s391
        %p393 = pneg %p188
        %p394 = pneg %p185
        %p395 = pneg %p216
        %p396 = pneg %p213
        %s397 = sand.u32 %s203, 1
        %s398 = scalar_lea.sflag [#allocation8], %s397
        %s399 = sand.u32 %s203, 1
        %s400 = smul.addr %s399, 8
        %s401 = scalar_lea.vmem [#allocation13], %s400
        %s402 = smul.u32 2, %s33
        %s403 = smul.u32 16, %s35
        %p404 = scmp.lt.s32.totalorder %s34, 0
        %s405 = scalar_select %p404, %s34, 0
        %s406 = scalar_lea.vmem %s3, %s405
        %s407 = sld [smem:[#allocation5 + %s33]]
        %p408 = scmp.eq.s32.totalorder %s34, 0
        %s409 = scalar_select %p408, %s35, 0
        %s410 = smul.u32 16, %s409
        %s411 = sld [smem:[#allocation5 + %s33]]
        %s412 = smul.u32 2, %s33
        %p414 = scmp.eq.s32.totalorder %s35, 0
        // Predicated region
        $region57: #{tpu_custom_call.1} parent=39 // pred_check
          %p415 = pneg %p414
        $region58: #{tpu_custom_call.1} parent=39 // pred_check_branch
          %417 = sbr.rel (%p415) target = $region60
        $region59: #{tpu_custom_call.1} parent=39 // pred_region
          %418 = vst [vmem:[#allocation2] sm:$0xff] 0.0
          %419 = vst [vmem:[#allocation2 + $0x8] sm:$0xff] 0.0
        $region60: #{tpu_custom_call.1} parent=39 // pred_fallthru
          _
        %p420 = scmp.eq.s32.totalorder %s34, 0
        %p421 = pnand %p420, %p414
        %p422 = pneg %p421
        // Predicated region
        $region61: #{tpu_custom_call.1} parent=39 // pred_check
          _
        $region62: #{tpu_custom_call.1} parent=39 // pred_check_branch
          %424 = sbr.rel (%p421) target = $region64
        $region63: #{tpu_custom_call.1} parent=39 // pred_region
          %425 = vst [vmem:[#allocation3] sm:$0xff] 0.0
          %426 = vst [vmem:[#allocation3 + $0x8] sm:$0xff] 0.0
        $region64: #{tpu_custom_call.1} parent=39 // pred_fallthru
          _
        %v427 = vld [vmem:[%s340] sm:$0xf]
        %v428 = vld [vmem:[%s340 + $0x4] sm:$0xf]
        %v429 = vld [vmem:[#allocation2] sm:$0xff]
        %v430 = vld [vmem:[#allocation2 + $0x8] sm:$0xff]
        %v431 = vld [vmem:[#allocation9] sm:$0xf]
        %v432 = vld [vmem:[#allocation9 + $0x4] sm:$0xf]
        %v433 = vld [vmem:[#allocation9 + $0x8] sm:$0xf]
        %v434 = vld [vmem:[#allocation9 + $0xc] sm:$0xf]
        %v435 = vld [vmem:[#allocation9 + $0x10] sm:$0xf]
        %v436 = vld [vmem:[#allocation9 + $0x14] sm:$0xf]
        %v437 = vld [vmem:[#allocation9 + $0x18] sm:$0xf]
        %v438 = vld [vmem:[#allocation9 + $0x1c] sm:$0xf]
        %v439 = vld [vmem:[#allocation9 + $0x20] sm:$0xf]
        %v440 = vld [vmem:[#allocation9 + $0x24] sm:$0xf]
        %v441 = vld [vmem:[#allocation9 + $0x28] sm:$0xf]
        %v442 = vld [vmem:[#allocation9 + $0x2c] sm:$0xf]
        %v443 = vld [vmem:[#allocation9 + $0x30] sm:$0xf]
        %v444 = vld [vmem:[#allocation9 + $0x34] sm:$0xf]
        %v445 = vld [vmem:[#allocation9 + $0x38] sm:$0xf]
        %v446 = vld [vmem:[#allocation9 + $0x3c] sm:$0xf]
        %v449 = vunpack.c.l.b16 %v427
        %v450 = vunpack.c.l.b16 %v428
        %v451 = vpack.c.b16 %v450, %v449
        %v469 = vunpack.c.l.b16 %v431
        %v470 = vunpack.c.l.b16 %v432
        %v471 = vunpack.c.l.b16 %v433
        %v472 = vunpack.c.l.b16 %v434
        %v473 = vunpack.c.l.b16 %v435
        %v474 = vunpack.c.l.b16 %v436
        %v475 = vunpack.c.l.b16 %v437
        %v476 = vunpack.c.l.b16 %v438
        %v477 = vunpack.c.l.b16 %v439
        %v478 = vunpack.c.l.b16 %v440
        %v479 = vunpack.c.l.b16 %v441
        %v480 = vunpack.c.l.b16 %v442
        %v481 = vunpack.c.l.b16 %v443
        %v482 = vunpack.c.l.b16 %v444
        %v483 = vunpack.c.l.b16 %v445
        %v484 = vunpack.c.l.b16 %v446
        %v485 = vpack.c.b16 %v470, %v469
        %v486 = vpack.c.b16 %v472, %v471
        %v487 = vpack.c.b16 %v474, %v473
        %v488 = vpack.c.b16 %v476, %v475
        %v489 = vpack.c.b16 %v478, %v477
        %v490 = vpack.c.b16 %v480, %v479
        %v491 = vpack.c.b16 %v482, %v481
        %v492 = vpack.c.b16 %v484, %v483
        %501 = vmatprep.subr.bf16.mxu0 0
        %502 = vmatpush1.bf16.msra.mxu0 %v485
        %503 = vmatprep.subr.bf16.mxu0 0
        %504 = vmatpush1.bf16.msra.mxu0 %v486
        %505 = vmatprep.subr.bf16.mxu0 0
        %506 = vmatpush1.bf16.msra.mxu0 %v487
        %507 = vmatprep.subr.bf16.mxu0 0
        %508 = vmatpush1.bf16.msra.mxu0 %v488
        %509 = vmatprep.subr.bf16.mxu0 0
        %510 = vmatpush1.bf16.msra.mxu0 %v489
        %511 = vmatprep.subr.bf16.mxu0 0
        %512 = vmatpush1.bf16.msra.mxu0 %v490
        %513 = vmatprep.subr.bf16.mxu0 0
        %514 = vmatpush1.bf16.msra.mxu0 %v491
        %515 = vmatprep.subr.bf16.mxu0 0
        %516 = vmatpush1.bf16.msra.mxu0 %v492
        %517 = vmatprep.subr.bf16.mxu0 0
        %518 = vmatpush1.bf16.msra.mxu0 0
        %519 = vmatprep.subr.bf16.mxu0 0
        %520 = vmatpush1.bf16.msra.mxu0 0
        %521 = vmatprep.subr.bf16.mxu0 0
        %522 = vmatpush1.bf16.msra.mxu0 0
        %523 = vmatprep.subr.bf16.mxu0 0
        %524 = vmatpush1.bf16.msra.mxu0 0
        %525 = vmatprep.subr.bf16.mxu0 0
        %526 = vmatpush1.bf16.msra.mxu0 0
        %527 = vmatprep.subr.bf16.mxu0 0
        %528 = vmatpush1.bf16.msra.mxu0 0
        %529 = vmatprep.subr.bf16.mxu0 0
        %530 = vmatpush1.bf16.msra.mxu0 0
        %531 = vmatprep.subr.bf16.mxu0 0
        %532 = vmatpush1.bf16.msra.mxu0 0
        %533 = vmatprep.mubr.bf16.mxu0 0
        %534 = vmatmul.mubr.bf16.gmra.mrb[0].mxu0 %v451
        %v535 = vpop.f32.mrb[0].mxu0
        %v536 = vadd.f32 0.0, %v535
        %v537 = vpop.f32.mrb[0].mxu0
        %v538 = vpop.f32.mrb[0].mxu0
        %v539 = vadd.f32 0.0, %v538
        %v540 = vpop.f32.mrb[0].mxu0
        %541 = vdwg.mxu0
        %v542 = vadd.f32 %v429, %v536
        %v543 = vadd.f32 %v430, %v539
        %544 = vst [vmem:[#allocation2] sm:$0xff] %v542
        %545 = vst [vmem:[#allocation2 + $0x8] sm:$0xff] %v543
        // Predicated region
        $region65: #{tpu_custom_call.1} parent=39 // pred_check
          %p546 = pneg %p420
        $region66: #{tpu_custom_call.1} parent=39 // pred_check_branch
          %548 = sbr.rel (%p546) target = $region68
        $region67: #{tpu_custom_call.1} parent=39 // pred_region
          %v549 = vld [vmem:[#allocation3] sm:$0xff]
          %v550 = vld [vmem:[#allocation3 + $0x8] sm:$0xff]
          %v551 = vld [vmem:[%s353] sm:$0xf]
          %v552 = vld [vmem:[%s353 + $0x4] sm:$0xf]
          %v553 = vld [vmem:[%s353 + $0x8] sm:$0xf]
          %v554 = vld [vmem:[%s353 + $0xc] sm:$0xf]
          %v555 = vld [vmem:[%s353 + $0x10] sm:$0xf]
          %v556 = vld [vmem:[%s353 + $0x14] sm:$0xf]
          %v557 = vld [vmem:[%s353 + $0x18] sm:$0xf]
          %v558 = vld [vmem:[%s353 + $0x1c] sm:$0xf]
          %v559 = vld [vmem:[%s353 + $0x20] sm:$0xf]
          %v560 = vld [vmem:[%s353 + $0x24] sm:$0xf]
          %v561 = vld [vmem:[%s353 + $0x28] sm:$0xf]
          %v562 = vld [vmem:[%s353 + $0x2c] sm:$0xf]
          %v563 = vld [vmem:[%s353 + $0x30] sm:$0xf]
          %v564 = vld [vmem:[%s353 + $0x34] sm:$0xf]
          %v565 = vld [vmem:[%s353 + $0x38] sm:$0xf]
          %v566 = vld [vmem:[%s353 + $0x3c] sm:$0xf]
          %v583 = vunpack.c.l.b16 %v551
          %v584 = vunpack.c.l.b16 %v552
          %v585 = vunpack.c.l.b16 %v553
          %v586 = vunpack.c.l.b16 %v554
          %v587 = vunpack.c.l.b16 %v555
          %v588 = vunpack.c.l.b16 %v556
          %v589 = vunpack.c.l.b16 %v557
          %v590 = vunpack.c.l.b16 %v558
          %v591 = vunpack.c.l.b16 %v559
          %v592 = vunpack.c.l.b16 %v560
          %v593 = vunpack.c.l.b16 %v561
          %v594 = vunpack.c.l.b16 %v562
          %v595 = vunpack.c.l.b16 %v563
          %v596 = vunpack.c.l.b16 %v564
          %v597 = vunpack.c.l.b16 %v565
          %v598 = vunpack.c.l.b16 %v566
          %v599 = vpack.c.b16 %v584, %v583
          %v600 = vpack.c.b16 %v586, %v585
          %v601 = vpack.c.b16 %v588, %v587
          %v602 = vpack.c.b16 %v590, %v589
          %v603 = vpack.c.b16 %v592, %v591
          %v604 = vpack.c.b16 %v594, %v593
          %v605 = vpack.c.b16 %v596, %v595
          %v606 = vpack.c.b16 %v598, %v597
          %615 = vmatprep.subr.bf16.mxu0 0
          %616 = vmatpush1.bf16.msra.mxu0 %v599
          %617 = vmatprep.subr.bf16.mxu0 0
          %618 = vmatpush1.bf16.msra.mxu0 %v600
          %619 = vmatprep.subr.bf16.mxu0 0
          %620 = vmatpush1.bf16.msra.mxu0 %v601
          %621 = vmatprep.subr.bf16.mxu0 0
          %622 = vmatpush1.bf16.msra.mxu0 %v602
          %623 = vmatprep.subr.bf16.mxu0 0
          %624 = vmatpush1.bf16.msra.mxu0 %v603
          %625 = vmatprep.subr.bf16.mxu0 0
          %626 = vmatpush1.bf16.msra.mxu0 %v604
          %627 = vmatprep.subr.bf16.mxu0 0
          %628 = vmatpush1.bf16.msra.mxu0 %v605
          %629 = vmatprep.subr.bf16.mxu0 0
          %630 = vmatpush1.bf16.msra.mxu0 %v606
          %631 = vmatprep.subr.bf16.mxu0 0
          %632 = vmatpush1.bf16.msra.mxu0 0
          %633 = vmatprep.subr.bf16.mxu0 0
          %634 = vmatpush1.bf16.msra.mxu0 0
          %635 = vmatprep.subr.bf16.mxu0 0
          %636 = vmatpush1.bf16.msra.mxu0 0
          %637 = vmatprep.subr.bf16.mxu0 0
          %638 = vmatpush1.bf16.msra.mxu0 0
          %639 = vmatprep.subr.bf16.mxu0 0
          %640 = vmatpush1.bf16.msra.mxu0 0
          %641 = vmatprep.subr.bf16.mxu0 0
          %642 = vmatpush1.bf16.msra.mxu0 0
          %643 = vmatprep.subr.bf16.mxu0 0
          %644 = vmatpush1.bf16.msra.mxu0 0
          %645 = vmatprep.subr.bf16.mxu0 0
          %646 = vmatpush1.bf16.msra.mxu0 0
          %647 = vmatprep.mubr.bf16.mxu0 0
          %648 = vmatmul.mubr.bf16.gmra.mrb[0].mxu0 %v451
          %v649 = vpop.f32.mrb[0].mxu0
          %v650 = vadd.f32 0.0, %v649
          %v651 = vpop.f32.mrb[0].mxu0
          %v652 = vpop.f32.mrb[0].mxu0
          %v653 = vadd.f32 0.0, %v652
          %v654 = vpop.f32.mrb[0].mxu0
          %655 = vdwg.mxu0
          %v656 = vadd.f32 %v549, %v650
          %v657 = vadd.f32 %v550, %v653
          %658 = vst [vmem:[#allocation3] sm:$0xff] %v656
          %659 = vst [vmem:[#allocation3 + $0x8] sm:$0xff] %v657
        $region68: #{tpu_custom_call.1} parent=39 // pred_fallthru
          _
        // Predicated region
        $region69: #{tpu_custom_call.1} parent=39 // pred_check
          %p660 = pneg %p414
        $region70: #{tpu_custom_call.1} parent=39 // pred_check_branch
          %662 = sbr.rel (%p660) target = $region72
        $region71: #{tpu_custom_call.1} parent=39 // pred_region
          %v663 = vld [vmem:[%s362] sm:$0xf]
          %v664 = vld [vmem:[%s362 + $0x4] sm:$0xf]
          %v665 = vld [vmem:[%s362 + $0x8] sm:$0xf]
          %v666 = vld [vmem:[%s362 + $0xc] sm:$0xf]
          %v667 = vld [vmem:[%s362 + $0x10] sm:$0xf]
          %v668 = vld [vmem:[%s362 + $0x14] sm:$0xf]
          %v669 = vld [vmem:[%s362 + $0x18] sm:$0xf]
          %v670 = vld [vmem:[%s362 + $0x1c] sm:$0xf]
          %v671 = vld [vmem:[%s362 + $0x20] sm:$0xf]
          %v672 = vld [vmem:[%s362 + $0x24] sm:$0xf]
          %v673 = vld [vmem:[%s362 + $0x28] sm:$0xf]
          %v674 = vld [vmem:[%s362 + $0x2c] sm:$0xf]
          %v675 = vld [vmem:[%s362 + $0x30] sm:$0xf]
          %v676 = vld [vmem:[%s362 + $0x34] sm:$0xf]
          %v677 = vld [vmem:[%s362 + $0x38] sm:$0xf]
          %v678 = vld [vmem:[%s362 + $0x3c] sm:$0xf]
          %v679 = vld [vmem:[#allocation3] sm:$0xff]
          %v680 = vld [vmem:[#allocation3 + $0x8] sm:$0xff]
          %v681 = vpack.c.bf16 %v680, %v679
          %v698 = vunpack.c.l.b16 %v663
          %v699 = vunpack.c.l.b16 %v664
          %v700 = vunpack.c.l.b16 %v665
          %v701 = vunpack.c.l.b16 %v666
          %v702 = vunpack.c.l.b16 %v667
          %v703 = vunpack.c.l.b16 %v668
          %v704 = vunpack.c.l.b16 %v669
          %v705 = vunpack.c.l.b16 %v670
          %v706 = vunpack.c.l.b16 %v671
          %v707 = vunpack.c.l.b16 %v672
          %v708 = vunpack.c.l.b16 %v673
          %v709 = vunpack.c.l.b16 %v674
          %v710 = vunpack.c.l.b16 %v675
          %v711 = vunpack.c.l.b16 %v676
          %v712 = vunpack.c.l.b16 %v677
          %v713 = vunpack.c.l.b16 %v678
          %v714 = vpack.c.b16 %v699, %v698
          %v715 = vpack.c.b16 %v701, %v700
          %v716 = vpack.c.b16 %v703, %v702
          %v717 = vpack.c.b16 %v705, %v704
          %v718 = vpack.c.b16 %v707, %v706
          %v719 = vpack.c.b16 %v709, %v708
          %v720 = vpack.c.b16 %v711, %v710
          %v721 = vpack.c.b16 %v713, %v712
          %730 = vmatprep.subr.bf16.mxu0 0
          %731 = vmatpush1.bf16.msra.mxu0 %v714
          %732 = vmatprep.subr.bf16.mxu0 0
          %733 = vmatpush1.bf16.msra.mxu0 %v715
          %734 = vmatprep.subr.bf16.mxu0 0
          %735 = vmatpush1.bf16.msra.mxu0 %v716
          %736 = vmatprep.subr.bf16.mxu0 0
          %737 = vmatpush1.bf16.msra.mxu0 %v717
          %738 = vmatprep.subr.bf16.mxu0 0
          %739 = vmatpush1.bf16.msra.mxu0 %v718
          %740 = vmatprep.subr.bf16.mxu0 0
          %741 = vmatpush1.bf16.msra.mxu0 %v719
          %742 = vmatprep.subr.bf16.mxu0 0
          %743 = vmatpush1.bf16.msra.mxu0 %v720
          %744 = vmatprep.subr.bf16.mxu0 0
          %745 = vmatpush1.bf16.msra.mxu0 %v721
          %746 = vmatprep.subr.bf16.mxu0 0
          %747 = vmatpush1.bf16.msra.mxu0 0
          %748 = vmatprep.subr.bf16.mxu0 0
          %749 = vmatpush1.bf16.msra.mxu0 0
          %750 = vmatprep.subr.bf16.mxu0 0
          %751 = vmatpush1.bf16.msra.mxu0 0
          %752 = vmatprep.subr.bf16.mxu0 0
          %753 = vmatpush1.bf16.msra.mxu0 0
          %754 = vmatprep.subr.bf16.mxu0 0
          %755 = vmatpush1.bf16.msra.mxu0 0
          %756 = vmatprep.subr.bf16.mxu0 0
          %757 = vmatpush1.bf16.msra.mxu0 0
          %758 = vmatprep.subr.bf16.mxu0 0
          %759 = vmatpush1.bf16.msra.mxu0 0
          %760 = vmatprep.subr.bf16.mxu0 0
          %761 = vmatpush1.bf16.msra.mxu0 0
          %762 = vmatprep.mubr.bf16.mxu0 0
          %763 = vmatmul.mubr.bf16.gmra.mrb[0].mxu0 %v681
          %v764 = vpop.f32.mrb[0].mxu0
          %v765 = vadd.f32 0.0, %v764
          %v766 = vpop.f32.mrb[0].mxu0
          %v767 = vpop.f32.mrb[0].mxu0
          %v768 = vadd.f32 0.0, %v767
          %v769 = vpop.f32.mrb[0].mxu0
          %770 = vdwg.mxu0
          %v771 = vld [vmem:[#allocation2] sm:$0xff]
          %v772 = vld [vmem:[#allocation2 + $0x8] sm:$0xff]
          %v773 = vld [vmem:[%s406] sm:$0x1]
          %v775 = vlaneseq
          %v776 = vshrl.u32 %v775, 7
          %v777 = vsub.s32 0, %v776
          %v778 = vrot.slane %v773, %v777
          %v780 = vadd.f32 %v771, %v778
          %v781 = vadd.f32 %v772, %v778
          %v782 = vmul.f32 %v765, 2.0
          %v783 = vmul.f32 %v768, 2.0
          %v784 = vadd.f32 %v780, %v782
          %v785 = vadd.f32 %v781, %v783
          %v786 = vpack.c.bf16 %v785, %v784
          %v788 = vunpack.c.l.b16 %v786
          %v789 = vunpack.c.h.b16 %v786
          %v790 = vpack.c.b16 %v788, %v788
          %v791 = vpack.c.b16 %v789, %v789
          %794 = vst [vmem:[%s401] sm:$0xf] %v790
          %795 = vst [vmem:[%s401 + $0x4] sm:$0xf] %v791
        $region72: #{tpu_custom_call.1} parent=39 // pred_fallthru
          _
        %s796 = sand.u32 %s203, 1
        %s797 = scalar_lea.sflag [#allocation8], %s796
        %s798 = sand.u32 %s203, 1
        %s799 = smul.addr %s798, 8
        %s800 = scalar_lea.vmem [#allocation13], %s799
        // Predicated region
        $region73: #{tpu_custom_call.1} parent=39 // pred_check
          %p801 = pneg %p213
        $region74: #{tpu_custom_call.1} parent=39 // pred_check_branch
          %803 = sbr.rel (%p801) target = $region76
        $region75: #{tpu_custom_call.1} parent=39 // pred_region
          %s804 = smul.u32 2, %s33
          %s806 = ssub.s32 128, 128
          %807 = vsyncadd %s797, %s806
          %s808 = sadd.s32 %s34, %s804
          %s809 = smul.addr %s808, 64
          %s810 = scalar_lea.hbm %s6, %s809
          %s811 = sshll.u32 %s800, 4
          %s812 = int_to_ptr.vmem [resolvable:$true] %s811
          %817 = dma.vmem_to_hbm [thread:$0]  %s812, 128, %s810, %s797, 64, 64, 4
        $region76: #{tpu_custom_call.1} parent=39 // pred_fallthru
          _
      $region40: #{tpu_custom_call.1} parent=5 // pred_fallthru
        _
      %p818 = scmp.le.s32.totalorder 2, %s23
      // Predicated region
      $region77: #{tpu_custom_call.1} parent=5 // pred_check
        %p819 = pneg %p818
      $region78: #{tpu_custom_call.1} parent=5 // pred_check_branch
        %821 = sbr.rel (%p819) target = $region80
      $region79: #{tpu_custom_call.1} parent=5 // pred_region
        %s822 = ssub.s32 %s23, 2
        // Predicated region
        $region81: #{tpu_custom_call.1} parent=79 // pred_check
          %p823 = pneg %p219
        $region82: #{tpu_custom_call.1} parent=79 // pred_check_branch
          %825 = sbr.rel (%p823) target = $region84
        $region83: #{tpu_custom_call.1} parent=79 // pred_region
          %s826 = sand.u32 %s204, 1
          %s827 = scalar_lea.sflag [#allocation8], %s826
          %s828 = sand.u32 %s204, 1
          %s829 = smul.addr %s828, 8
          %s830 = scalar_lea.vmem [#allocation13], %s829
          %831 = dma.done %s827, 128
        $region84: #{tpu_custom_call.1} parent=79 // pred_fallthru
          _
      $region80: #{tpu_custom_call.1} parent=5 // pred_fallthru
        _
    $region6: #{tpu_custom_call.1} parent=1 // loop_footer
      %s27 = sadd.s32 1, %s23
    $region7: #{tpu_custom_call.1} parent=1 // loop_footer_branch
      %22 = sbr.rel target = $region3
    $region8: #{tpu_custom_call.1} parent=1 // loop_exit
      _
    %832 = vsyncpa [#allocation7], 1
    %s833 = scalar_lea.sflag [#allocation7], 1
    %834 = vsyncpa %s833, 1
    %835 = vsyncpa [#allocation10], 1
    %836 = vsyncpa [#allocation8], 1
    %s837 = scalar_lea.sflag [#allocation8], 1
    %838 = vsyncpa %s837, 1

</llo_original>
